<compile_context>
chip_gen: v7x
topology: tpu7x:2x2x1
jax: 0.10.0
libtpu: 0.0.40
codegen_flags: <defaults>
</compile_context>

<pallas_src>
import math
from functools import partial

import jax
import jax.numpy as jnp
from jax.experimental import pallas as pl
from jax.experimental.pallas import tpu as pltpu

LANES = 128  # every time axis is zero-padded to this lane width inside the kernel


# --------------------------------------------------------------------------- #
# Fused Pallas kernel (Bt batch elements folded onto sublanes per grid step)
# --------------------------------------------------------------------------- #
def _upsampling_block_kernel(xin_ref, ident_ref, sc_ref, w_up_ref, b_up_ref,
                             w_c_ref, b_c_ref, out_ref, *, K, depth, T_sc,
                             L_res, BC):
    """Fused UpsamplingBlock forward. Layout: time on lanes, (batch, chan) on sublanes.

      xin_ref   : (BC, LANES)              bf16  zero-stuffed / cropped tconv input
      ident_ref : (BC, LANES)              bf16  duplicate(x) cropped to L_res
      sc_ref    : (BC, LANES)              bf16  shortcut, valid lanes [0, T_sc)
      w_up_ref  : (2*BC, K*BC)             bf16  fused (filter|gate) upconv weights
      b_up_ref  : (2*BC, 1)                f32
      w_c_ref   : (depth, 2*BC, 2*K*BC)    bf16  per-layer fused conv weights
      b_c_ref   : (depth, 2*BC, 1)         f32
      out_ref   : (BC, LANES)              f32   valid lanes [0, L_res - depth*(K-1))
    """
    f32 = jnp.float32
    bf16 = jnp.bfloat16

    def shl(a, k):
        # Left shift along lanes: result[:, j] = a[:, (j + k) % LANES]  (XLU rotate).
        # Wrapped lanes land far beyond every valid region (asserted in the wrapper),
        # so no zero-fill mask is needed.
        return a if k == 0 else pltpu.roll(a, shift=(LANES - k) % LANES, axis=1)

    def im2col(sig, off):
        # (BC, LANES) f32 -> (K*BC, LANES) f32: K tap windows stacked k-major.
        # Each slab is a full (8,128) f32 tile -> tile-aligned concatenate.
        return jnp.concatenate([shl(sig, off + k) for k in range(K)], axis=0)

    def gates(acc):
        # fused rows: [0, BC) = filter, [BC, 2*BC) = gate  -> tile-aligned slices.
        return jnp.tanh(acc[:BC]) * jax.nn.sigmoid(acc[BC:])

    xin = xin_ref[...].astype(f32)   # exact (values are bf16-representable)
    sc = sc_ref[...].astype(f32)

    # ---- upconv: ResidualLayer(transpose=True, stride) -----------------------
    acc = jnp.dot(w_up_ref[...], im2col(xin, 0).astype(bf16),
                  preferred_element_type=f32) + b_up_ref[...]
    upsampled = ident_ref[...].astype(f32) + gates(acc)          # valid [0, L_res)

    # ---- combined = Crop1d('front')(shortcut, upsampled) ---------------------
    combined = shl(sc, T_sc - L_res)                             # valid [0, L_res)

    # ---- depth x ResidualLayer(stride=1), conditional = cropped upsampled ----
    for d in range(depth):
        cond_off = d * (K - 1)     # Crop1d('front')(upsampled, combined)
        stacked = jnp.concatenate([im2col(combined, 0),
                                   im2col(upsampled, cond_off)], axis=0)
        acc = jnp.dot(w_c_ref[d], stacked.astype(bf16),
                      preferred_element_type=f32) + b_c_ref[d]
        combined = shl(combined, K - 1) + gates(acc)             # identity + residual

    out_ref[...] = combined.astype(out_ref.dtype)


# --------------------------------------------------------------------------- #
# Parameter initialization (PyTorch layouts kept under 'raw'; per-tap taps under
# 'taps' — the wrapper fuses them for the chosen batch block size)
# --------------------------------------------------------------------------- #
def init_params(key, n_channels, n_shortcut, kernel_size, depth):
    C, C_sc, K = n_channels, n_shortcut, kernel_size
    assert C_sc == C          # identity add inside the conv layers requires this
    keys = jax.random.split(key, 4 + 4 * depth)
    nrm = jax.random.normal

    raw = {
        'up_wf': 0.2 * nrm(keys[0], (C, C, K), jnp.float32),   # ConvTranspose1d: (Cin, Cout, K)
        'up_wg': 0.2 * nrm(keys[1], (C, C, K), jnp.float32),
        'up_bf': 0.1 * nrm(keys[2], (C,), jnp.float32),
        'up_bg': 0.1 * nrm(keys[3], (C,), jnp.float32),
    }
    for d in range(depth):
        kf, kg, kbf, kbg = keys[4 + 4 * d: 8 + 4 * d]
        raw[f'c{d}_wf'] = 0.2 * nrm(kf, (C, C + C_sc, K), jnp.float32)   # Conv1d: (Cout, Cin, K)
        raw[f'c{d}_wg'] = 0.2 * nrm(kg, (C, C + C_sc, K), jnp.float32)
        raw[f'c{d}_bf'] = 0.1 * nrm(kbf, (C,), jnp.float32)
        raw[f'c{d}_bg'] = 0.1 * nrm(kbg, (C,), jnp.float32)

    def tconv_taps(w):   # (Cin, Cout, K) -> (K, Cout, Cin), taps flipped (valid-conv form)
        return jnp.transpose(jnp.flip(w, axis=2), (2, 1, 0))

    def conv_taps(w):    # (Cout, Cin, K) -> (K, Cout, Cin)
        return jnp.transpose(w, (2, 0, 1))

    cc_f, cc_g, cd_f, cd_g, c_bf, c_bg = [], [], [], [], [], []
    for d in range(depth):
        tf, tg = conv_taps(raw[f'c{d}_wf']), conv_taps(raw[f'c{d}_wg'])
        cc_f.append(tf[:, :, :C]); cd_f.append(tf[:, :, C:])
        cc_g.append(tg[:, :, :C]); cd_g.append(tg[:, :, C:])
        c_bf.append(raw[f'c{d}_bf']); c_bg.append(raw[f'c{d}_bg'])

    taps = {
        'up_f': tconv_taps(raw['up_wf']), 'up_g': tconv_taps(raw['up_wg']),
        'up_bf': raw['up_bf'], 'up_bg': raw['up_bg'],
        'cc_f': jnp.stack(cc_f), 'cc_g': jnp.stack(cc_g),
        'cd_f': jnp.stack(cd_f), 'cd_g': jnp.stack(cd_g),
        'c_bf': jnp.stack(c_bf), 'c_bg': jnp.stack(c_bg),
    }
    return {'raw': raw, 'taps': taps}


# --------------------------------------------------------------------------- #
# UpsamplingBlock.get_input_size replica (sets pad_front exactly like PyTorch)
# --------------------------------------------------------------------------- #
def get_input_size(output_size, kernel_size, stride, depth):
    curr = output_size
    for _ in range(depth):
        curr = curr + kernel_size - 1          # stride-1 conv layers
    curr = curr + kernel_size - 1              # transposed conv layer
    pad_front = (curr - 1) % stride
    curr = int(math.ceil(curr / stride))
    assert curr > 0
    return curr, pad_front


# --------------------------------------------------------------------------- #
# Fused-weight helpers (block-diagonal over the folded batch, im2col over taps)
# --------------------------------------------------------------------------- #
def _pick_block_batch(B, C):
    divs = [d for d in range(1, B + 1) if B % d == 0]
    full = [d for d in divs if (d * C) % 8 == 0]           # full f32 sublane tiles
    two_step = [d for d in full if B // d >= 2]            # keep >=2 grid steps (v7x)
    if two_step:
        return max(two_step)
    if full:
        return min(full)
    return max([d for d in divs if B // d >= 2] or [B])


def _fuse_gated_weights(tap_f, tap_g, Bt):
    """(K, Co, Ci) filter/gate taps -> (2*Bt*Co, K*Bt*Ci) block-diag (over folded
    batch) im2col weight; rows = [filter(b,o)..., gate(b,o)...], cols = (k, b, i)."""
    Kk, Co, Ci = tap_f.shape
    eye = jnp.eye(Bt, dtype=tap_f.dtype)

    def expand(t):
        return jnp.einsum('koi,bc->bokci', t, eye).reshape(Bt * Co, Kk * Bt * Ci)

    return jnp.concatenate([expand(tap_f), expand(tap_g)], axis=0)


def _fuse_gated_bias(b_f, b_g, Bt):
    return jnp.concatenate([jnp.tile(b_f, Bt), jnp.tile(b_g, Bt)]
                           ).reshape(-1, 1).astype(jnp.float32)


# --------------------------------------------------------------------------- #
# Forward wrapper: single fused pallas_call, NCT in / NCT out
# --------------------------------------------------------------------------- #
def upsampling_block_forward(params, x_nct, shortcut_nct, *, kernel_size, stride,
                             depth, pad_front, block_batch=None):
    K, s = kernel_size, stride
    B, C, T = x_nct.shape
    Bs, C_sc, T_sc = shortcut_nct.shape
    assert Bs == B and C_sc == C
    crop_front = K - 1 - pad_front
    assert crop_front >= 0
    L_res = (T - 1) * s + 1 - crop_front        # upconv residual (= upsampled) length
    out_len = L_res - depth * (K - 1)
    assert out_len > 0 and T_sc >= L_res
    assert T_sc <= LANES and L_res + K - 1 <= LANES, \
        "single-tile kernel; tile the time axis with a (K-1) halo for longer sequences"
    # Circular rolls: wrapped garbage must stay clear of every lane that is read
    # (directly or transitively) for a valid output lane.
    assert (T_sc - L_res) + (2 * depth + 2) * (K - 1) + max(T_sc, L_res + K - 1) <= LANES

    Bt = block_batch if block_batch is not None else _pick_block_batch(B, C)
    assert B % Bt == 0
    BC = Bt * C
    bf16 = jnp.bfloat16

    # ---- input prep: fuses into the pad/cast XLA fusion that feeds the kernel ----
    xb = x_nct.astype(bf16)
    # zero-stuffed + front-cropped ConvTranspose1d input: valid lanes [0, L_res+K-1)
    stuffed = jnp.zeros((B, C, (T - 1) * s + 1), bf16).at[:, :, ::s].set(xb)
    xin = jnp.pad(stuffed, ((0, 0), (0, 0),
                            (pad_front, LANES - pad_front - stuffed.shape[2])))
    # duplicate(x) identity, front-cropped to L_res
    ident = jnp.repeat(xb, s, axis=2)[:, :, s * T - L_res:]
    ident = jnp.pad(ident, ((0, 0), (0, 0), (0, LANES - L_res)))
    scp = jnp.pad(shortcut_nct.astype(bf16), ((0, 0), (0, 0), (0, LANES - T_sc)))
    # fold batch onto sublanes: (B, C, LANES) -> (B*C, LANES)  (free HBM reshape)
    xin2, ident2, sc2 = [a.reshape(B * C, LANES) for a in (xin, ident, scp)]

    # ---- fused, Bt-block-diagonal im2col weights (bf16) + f32 biases ----------
    taps = params['taps']
    w_up = _fuse_gated_weights(taps['up_f'], taps['up_g'], Bt).astype(bf16)
    b_up = _fuse_gated_bias(taps['up_bf'], taps['up_bg'], Bt)
    w_c = jnp.stack([
        jnp.concatenate([_fuse_gated_weights(taps['cc_f'][d], taps['cc_g'][d], Bt),
                         _fuse_gated_weights(taps['cd_f'][d], taps['cd_g'][d], Bt)],
                        axis=1)
        for d in range(depth)]).astype(bf16)                     # (depth, 2BC, 2K*BC)
    b_c = jnp.stack([_fuse_gated_bias(taps['c_bf'][d], taps['c_bg'][d], Bt)
                     for d in range(depth)])                     # (depth, 2BC, 1)

    kern = partial(_upsampling_block_kernel, K=K, depth=depth, T_sc=T_sc,
                   L_res=L_res, BC=BC)
    out2 = pl.pallas_call(
        kern,
        out_shape=jax.ShapeDtypeStruct((B * C, LANES), jnp.float32),
        grid=(B // Bt,),
        in_specs=[
            pl.BlockSpec((BC, LANES), lambda g: (g, 0)),
            pl.BlockSpec((BC, LANES), lambda g: (g, 0)),
            pl.BlockSpec((BC, LANES), lambda g: (g, 0)),
            pl.BlockSpec(w_up.shape, lambda g: (0, 0)),
            pl.BlockSpec(b_up.shape, lambda g: (0, 0)),
            pl.BlockSpec(w_c.shape, lambda g: (0, 0, 0)),
            pl.BlockSpec(b_c.shape, lambda g: (0, 0, 0)),
        ],
        out_specs=pl.BlockSpec((BC, LANES), lambda g: (g, 0)),
        compiler_params=pltpu.CompilerParams(
            dimension_semantics=("parallel",)),   # v7x: batch blocks split across TCs
    )(xin2, ident2, sc2, w_up, b_up, w_c, b_c)

    return out2.reshape(B, C, LANES)[:, :, :out_len]


# --------------------------------------------------------------------------- #
# Pure-jnp reference (mirrors the PyTorch module; same bf16 rounding of matmul
# operands as the kernel, f32 accumulation) — used for a numerical self-check.
# --------------------------------------------------------------------------- #
def reference_forward(raw, x_nct, sc_nct, *, kernel_size, stride, depth, pad_front):
    K, s = kernel_size, stride
    f32 = jnp.float32
    rnd = lambda a: a.astype(jnp.bfloat16).astype(f32)

    def conv_valid(inp, w):           # inp (B,Ci,L), w (Co,Ci,K) -> (B,Co,L-K+1)
        inp, w = rnd(inp), rnd(w)
        L = inp.shape[2] - K + 1
        acc = jnp.zeros((inp.shape[0], w.shape[0], L), f32)
        for k in range(K):
            acc = acc + jnp.einsum('oi,bil->bol', w[:, :, k], inp[:, :, k:k + L],
                                   preferred_element_type=f32)
        return acc

    x = rnd(x_nct.astype(f32))
    shortcut = rnd(sc_nct.astype(f32))
    B, C, T = x.shape
    crop_front = K - 1 - pad_front
    L_res = (T - 1) * s + 1 - crop_front

    # upconv: transposed conv == valid conv over the zero-stuffed input, flipped taps
    u = jnp.zeros((B, C, (T - 1) * s + 1), f32).at[:, :, ::s].set(x)
    up = jnp.pad(u, ((0, 0), (0, 0), (K - 1, K - 1)))
    xin = up[:, :, crop_front: crop_front + L_res + K - 1]
    wf_eff = jnp.transpose(jnp.flip(raw['up_wf'], axis=2), (1, 0, 2))   # (Co, Ci, K)
    wg_eff = jnp.transpose(jnp.flip(raw['up_wg'], axis=2), (1, 0, 2))
    filt = jnp.tanh(conv_valid(xin, wf_eff) + raw['up_bf'][None, :, None])
    gate = jax.nn.sigmoid(conv_valid(xin, wg_eff) + raw['up_bg'][None, :, None])
    ident = jnp.repeat(x, s, axis=2)[:, :, s * T - L_res:]
    upsampled = ident + filt * gate

    combined = shortcut[:, :, shortcut.shape[2] - L_res:]
    for d in range(depth):
        Lc = combined.shape[2]
        cond = upsampled[:, :, L_res - Lc:]
        res_in = jnp.concatenate([combined, cond], axis=1)
        identity = combined[:, :, K - 1:]
        filt = jnp.tanh(conv_valid(res_in, raw[f'c{d}_wf']) + raw[f'c{d}_bf'][None, :, None])
        gate = jax.nn.sigmoid(conv_valid(res_in, raw[f'c{d}_wg']) + raw[f'c{d}_bg'][None, :, None])
        combined = identity + filt * gate
    return combined


# --------------------------------------------------------------------------- #
if __name__ == "__main__":
    B, n_channels, n_shortcut = 4, 4, 4       # identity add requires n_shortcut == n_channels
    kernel_size, stride, depth = 3, 2, 2
    output_size = 8

    T, pad_front = get_input_size(output_size, kernel_size, stride, depth)
    L_up = output_size + depth * (kernel_size - 1)
    shortcut_len = L_up + 3                    # anything >= L_up; Crop1d('front') trims it

    key = jax.random.PRNGKey(0)
    kp, kx, ks = jax.random.split(key, 3)
    params = init_params(kp, n_channels, n_shortcut, kernel_size, depth)
    x = jax.random.normal(kx, (B, n_channels, T), jnp.float32)                 # NCT
    shortcut = jax.random.normal(ks, (B, n_shortcut, shortcut_len), jnp.float32)

    fwd = jax.jit(partial(upsampling_block_forward, kernel_size=kernel_size,
                          stride=stride, depth=depth, pad_front=pad_front))
    out = jax.block_until_ready(fwd(params, x, shortcut))
    assert out.shape == (B, n_channels, output_size), out.shape
    assert bool(jnp.all(jnp.isfinite(out)))

    ref = reference_forward(params['raw'], x, shortcut,
                            kernel_size=kernel_size, stride=stride,
                            depth=depth, pad_front=pad_front)
    err = float(jnp.max(jnp.abs(out - ref)))
    assert err < 5e-2, f"mismatch vs jnp reference: {err}"
    print("KERNEL_OK")
</pallas_src>

<mosaic_0001>
module attributes {stable_mosaic.version = 11 : i64} {
  func.func @_upsampling_block_kernel(%arg0: i32, %arg1: memref<8x128xbf16, #tpu.memory_space<vmem>>, %arg2: memref<8x128xbf16, #tpu.memory_space<vmem>>, %arg3: memref<8x128xbf16, #tpu.memory_space<vmem>>, %arg4: memref<16x24xbf16, #tpu.memory_space<vmem>>, %arg5: memref<16x1xf32, #tpu.memory_space<vmem>>, %arg6: memref<2x16x48xbf16, #tpu.memory_space<vmem>>, %arg7: memref<2x16x1xf32, #tpu.memory_space<vmem>>, %arg8: memref<8x128xf32, #tpu.memory_space<vmem>>) attributes {dimension_semantics = [#tpu.dimension_semantics<parallel>], iteration_bounds = array<i64: 2>, scalar_prefetch = 0 : i64, scratch_operands = 0 : i64, tpu.core_type = #tpu.core_type<tc>, window_params = [{transform_indices = @transform_0, window_bounds = array<i64: 8, 128>}, {transform_indices = @transform_1, window_bounds = array<i64: 8, 128>}, {transform_indices = @transform_2, window_bounds = array<i64: 8, 128>}, {pipeline_mode = #tpu.pipeline_mode<synchronous>, transform_indices = @transform_3, window_bounds = array<i64: 16, 24>}, {pipeline_mode = #tpu.pipeline_mode<synchronous>, transform_indices = @transform_4, window_bounds = array<i64: 16, 1>}, {pipeline_mode = #tpu.pipeline_mode<synchronous>, transform_indices = @transform_5, window_bounds = array<i64: 2, 16, 48>}, {pipeline_mode = #tpu.pipeline_mode<synchronous>, transform_indices = @transform_6, window_bounds = array<i64: 2, 16, 1>}, {transform_indices = @transform_7, window_bounds = array<i64: 8, 128>}]} {
    %c0 = arith.constant 0 : index
    %c0_0 = arith.constant 0 : index
    %0 = vector.load %arg1[%c0, %c0_0] : memref<8x128xbf16, #tpu.memory_space<vmem>>, vector<8x128xbf16>
    %1 = arith.extf %0 : vector<8x128xbf16> to vector<8x128xf32>
    %c0_1 = arith.constant 0 : index
    %c0_2 = arith.constant 0 : index
    %2 = vector.load %arg3[%c0_1, %c0_2] : memref<8x128xbf16, #tpu.memory_space<vmem>>, vector<8x128xbf16>
    %3 = arith.extf %2 : vector<8x128xbf16> to vector<8x128xf32>
    %c0_3 = arith.constant 0 : index
    %c0_4 = arith.constant 0 : index
    %4 = vector.load %arg4[%c0_3, %c0_4] : memref<16x24xbf16, #tpu.memory_space<vmem>>, vector<16x24xbf16>
    %c127_i32 = arith.constant 127 : i32
    %5 = tpu.dynamic_rotate %1 by %c127_i32 dim 1 : vector<8x128xf32>, i32 -> vector<8x128xf32>
    %c126_i32 = arith.constant 126 : i32
    %6 = tpu.dynamic_rotate %1 by %c126_i32 dim 1 : vector<8x128xf32>, i32 -> vector<8x128xf32>
    %7 = tpu.concatenate %1, %5, %6 in 0 : vector<8x128xf32>, vector<8x128xf32>, vector<8x128xf32> -> vector<24x128xf32>
    %8 = arith.truncf %7 : vector<24x128xf32> to vector<24x128xbf16>
    %cst = arith.constant dense<0.000000e+00> : vector<16x128xf32>
    %9 = tpu.matmul %4, %8, %cst {dimension_numbers = #tpu.dot_dimension_numbers<[1], [0], [0], [1], [0, 0, 1, 1], [], []>} : vector<16x24xbf16>, vector<24x128xbf16>, vector<16x128xf32> -> vector<16x128xf32>
    %c0_5 = arith.constant 0 : index
    %c0_6 = arith.constant 0 : index
    %10 = vector.load %arg5[%c0_5, %c0_6] : memref<16x1xf32, #tpu.memory_space<vmem>>, vector<16x1xf32>
    %11 = vector.broadcast %10 : vector<16x1xf32> to vector<16x128xf32>
    %12 = arith.addf %9, %11 : vector<16x128xf32>
    %c0_7 = arith.constant 0 : index
    %c0_8 = arith.constant 0 : index
    %13 = vector.load %arg2[%c0_7, %c0_8] : memref<8x128xbf16, #tpu.memory_space<vmem>>, vector<8x128xbf16>
    %14 = arith.extf %13 : vector<8x128xbf16> to vector<8x128xf32>
    %15 = vector.extract_strided_slice %12 {offsets = [0, 0], sizes = [8, 128], strides = [1, 1]} : vector<16x128xf32> to vector<8x128xf32>
    %16 = math.tanh %15 : vector<8x128xf32>
    %17 = vector.extract_strided_slice %12 {offsets = [8, 0], sizes = [8, 128], strides = [1, 1]} : vector<16x128xf32> to vector<8x128xf32>
    %18 = arith.negf %17 : vector<8x128xf32>
    %19 = math.exp %18 : vector<8x128xf32>
    %cst_9 = arith.constant 1.000000e+00 : f32
    %20 = vector.broadcast %cst_9 : f32 to vector<8x128xf32>
    %21 = arith.addf %20, %19 : vector<8x128xf32>
    %22 = arith.divf %20, %21 : vector<8x128xf32>
    %23 = arith.mulf %16, %22 : vector<8x128xf32>
    %24 = arith.addf %14, %23 : vector<8x128xf32>
    %c125_i32 = arith.constant 125 : i32
    %25 = tpu.dynamic_rotate %3 by %c125_i32 dim 1 : vector<8x128xf32>, i32 -> vector<8x128xf32>
    %c127_i32_10 = arith.constant 127 : i32
    %26 = tpu.dynamic_rotate %25 by %c127_i32_10 dim 1 : vector<8x128xf32>, i32 -> vector<8x128xf32>
    %c126_i32_11 = arith.constant 126 : i32
    %27 = tpu.dynamic_rotate %25 by %c126_i32_11 dim 1 : vector<8x128xf32>, i32 -> vector<8x128xf32>
    %28 = tpu.concatenate %25, %26, %27 in 0 : vector<8x128xf32>, vector<8x128xf32>, vector<8x128xf32> -> vector<24x128xf32>
    %c127_i32_12 = arith.constant 127 : i32
    %29 = tpu.dynamic_rotate %24 by %c127_i32_12 dim 1 : vector<8x128xf32>, i32 -> vector<8x128xf32>
    %c126_i32_13 = arith.constant 126 : i32
    %30 = tpu.dynamic_rotate %24 by %c126_i32_13 dim 1 : vector<8x128xf32>, i32 -> vector<8x128xf32>
    %31 = tpu.concatenate %24, %29, %30 in 0 : vector<8x128xf32>, vector<8x128xf32>, vector<8x128xf32> -> vector<24x128xf32>
    %32 = tpu.concatenate %28, %31 in 0 : vector<24x128xf32>, vector<24x128xf32> -> vector<48x128xf32>
    %c0_14 = arith.constant 0 : index
    %c0_15 = arith.constant 0 : index
    %c0_16 = arith.constant 0 : index
    %33 = vector.load %arg6[%c0_14, %c0_15, %c0_16] : memref<2x16x48xbf16, #tpu.memory_space<vmem>>, vector<1x16x48xbf16>
    %34 = vector.shape_cast %33 : vector<1x16x48xbf16> to vector<16x48xbf16>
    %35 = arith.truncf %32 : vector<48x128xf32> to vector<48x128xbf16>
    %cst_17 = arith.constant dense<0.000000e+00> : vector<16x128xf32>
    %36 = tpu.matmul %34, %35, %cst_17 {dimension_numbers = #tpu.dot_dimension_numbers<[1], [0], [0], [1], [0, 0, 1, 1], [], []>} : vector<16x48xbf16>, vector<48x128xbf16>, vector<16x128xf32> -> vector<16x128xf32>
    %c0_18 = arith.constant 0 : index
    %c0_19 = arith.constant 0 : index
    %c0_20 = arith.constant 0 : index
    %37 = vector.load %arg7[%c0_18, %c0_19, %c0_20] : memref<2x16x1xf32, #tpu.memory_space<vmem>>, vector<1x16x1xf32>
    %38 = vector.shape_cast %37 : vector<1x16x1xf32> to vector<16x1xf32>
    %39 = vector.broadcast %38 : vector<16x1xf32> to vector<16x128xf32>
    %40 = arith.addf %36, %39 : vector<16x128xf32>
    %c126_i32_21 = arith.constant 126 : i32
    %41 = tpu.dynamic_rotate %25 by %c126_i32_21 dim 1 : vector<8x128xf32>, i32 -> vector<8x128xf32>
    %42 = vector.extract_strided_slice %40 {offsets = [0, 0], sizes = [8, 128], strides = [1, 1]} : vector<16x128xf32> to vector<8x128xf32>
    %43 = math.tanh %42 : vector<8x128xf32>
    %44 = vector.extract_strided_slice %40 {offsets = [8, 0], sizes = [8, 128], strides = [1, 1]} : vector<16x128xf32> to vector<8x128xf32>
    %45 = arith.negf %44 : vector<8x128xf32>
    %46 = math.exp %45 : vector<8x128xf32>
    %cst_22 = arith.constant 1.000000e+00 : f32
    %47 = vector.broadcast %cst_22 : f32 to vector<8x128xf32>
    %48 = arith.addf %47, %46 : vector<8x128xf32>
    %49 = arith.divf %47, %48 : vector<8x128xf32>
    %50 = arith.mulf %43, %49 : vector<8x128xf32>
    %51 = arith.addf %41, %50 : vector<8x128xf32>
    %c127_i32_23 = arith.constant 127 : i32
    %52 = tpu.dynamic_rotate %51 by %c127_i32_23 dim 1 : vector<8x128xf32>, i32 -> vector<8x128xf32>
    %c126_i32_24 = arith.constant 126 : i32
    %53 = tpu.dynamic_rotate %51 by %c126_i32_24 dim 1 : vector<8x128xf32>, i32 -> vector<8x128xf32>
    %54 = tpu.concatenate %51, %52, %53 in 0 : vector<8x128xf32>, vector<8x128xf32>, vector<8x128xf32> -> vector<24x128xf32>
    %c126_i32_25 = arith.constant 126 : i32
    %55 = tpu.dynamic_rotate %24 by %c126_i32_25 dim 1 : vector<8x128xf32>, i32 -> vector<8x128xf32>
    %c125_i32_26 = arith.constant 125 : i32
    %56 = tpu.dynamic_rotate %24 by %c125_i32_26 dim 1 : vector<8x128xf32>, i32 -> vector<8x128xf32>
    %c124_i32 = arith.constant 124 : i32
    %57 = tpu.dynamic_rotate %24 by %c124_i32 dim 1 : vector<8x128xf32>, i32 -> vector<8x128xf32>
    %58 = tpu.concatenate %55, %56, %57 in 0 : vector<8x128xf32>, vector<8x128xf32>, vector<8x128xf32> -> vector<24x128xf32>
    %59 = tpu.concatenate %54, %58 in 0 : vector<24x128xf32>, vector<24x128xf32> -> vector<48x128xf32>
    %c1 = arith.constant 1 : index
    %c0_27 = arith.constant 0 : index
    %c0_28 = arith.constant 0 : index
    %60 = vector.load %arg6[%c1, %c0_27, %c0_28] : memref<2x16x48xbf16, #tpu.memory_space<vmem>>, vector<1x16x48xbf16>
    %61 = vector.shape_cast %60 : vector<1x16x48xbf16> to vector<16x48xbf16>
    %62 = arith.truncf %59 : vector<48x128xf32> to vector<48x128xbf16>
    %cst_29 = arith.constant dense<0.000000e+00> : vector<16x128xf32>
    %63 = tpu.matmul %61, %62, %cst_29 {dimension_numbers = #tpu.dot_dimension_numbers<[1], [0], [0], [1], [0, 0, 1, 1], [], []>} : vector<16x48xbf16>, vector<48x128xbf16>, vector<16x128xf32> -> vector<16x128xf32>
    %c1_30 = arith.constant 1 : index
    %c0_31 = arith.constant 0 : index
    %c0_32 = arith.constant 0 : index
    %64 = vector.load %arg7[%c1_30, %c0_31, %c0_32] : memref<2x16x1xf32, #tpu.memory_space<vmem>>, vector<1x16x1xf32>
    %65 = vector.shape_cast %64 : vector<1x16x1xf32> to vector<16x1xf32>
    %66 = vector.broadcast %65 : vector<16x1xf32> to vector<16x128xf32>
    %67 = arith.addf %63, %66 : vector<16x128xf32>
    %c126_i32_33 = arith.constant 126 : i32
    %68 = tpu.dynamic_rotate %51 by %c126_i32_33 dim 1 : vector<8x128xf32>, i32 -> vector<8x128xf32>
    %69 = vector.extract_strided_slice %67 {offsets = [0, 0], sizes = [8, 128], strides = [1, 1]} : vector<16x128xf32> to vector<8x128xf32>
    %70 = math.tanh %69 : vector<8x128xf32>
    %71 = vector.extract_strided_slice %67 {offsets = [8, 0], sizes = [8, 128], strides = [1, 1]} : vector<16x128xf32> to vector<8x128xf32>
    %72 = arith.negf %71 : vector<8x128xf32>
    %73 = math.exp %72 : vector<8x128xf32>
    %cst_34 = arith.constant 1.000000e+00 : f32
    %74 = vector.broadcast %cst_34 : f32 to vector<8x128xf32>
    %75 = arith.addf %74, %73 : vector<8x128xf32>
    %76 = arith.divf %74, %75 : vector<8x128xf32>
    %77 = arith.mulf %70, %76 : vector<8x128xf32>
    %78 = arith.addf %68, %77 : vector<8x128xf32>
    %c0_35 = arith.constant 0 : index
    %c0_36 = arith.constant 0 : index
    %79 = vector.load %arg8[%c0_35, %c0_36] : memref<8x128xf32, #tpu.memory_space<vmem>>, vector<8x128xf32>
    tpu.vector_store %arg8[%c0_35, %c0_36], %78 {strides = array<i32>} : memref<8x128xf32, #tpu.memory_space<vmem>>, vector<8x128xf32>,
    return
  }
  func.func @transform_0(%arg0: i32) -> (i32, i32) {
    %c0_i32 = arith.constant 0 : i32
    %c0_i32_0 = arith.constant 0 : i32
    return %arg0, %c0_i32 : i32, i32
  }
  func.func @transform_1(%arg0: i32) -> (i32, i32) {
    %c0_i32 = arith.constant 0 : i32
    %c0_i32_0 = arith.constant 0 : i32
    return %arg0, %c0_i32 : i32, i32
  }
  func.func @transform_2(%arg0: i32) -> (i32, i32) {
    %c0_i32 = arith.constant 0 : i32
    %c0_i32_0 = arith.constant 0 : i32
    return %arg0, %c0_i32 : i32, i32
  }
  func.func @transform_3(%arg0: i32) -> (i32, i32) {
    %c0_i32 = arith.constant 0 : i32
    %c0_i32_0 = arith.constant 0 : i32
    %c0_i32_1 = arith.constant 0 : i32
    return %c0_i32, %c0_i32_0 : i32, i32
  }
  func.func @transform_4(%arg0: i32) -> (i32, i32) {
    %c0_i32 = arith.constant 0 : i32
    %c0_i32_0 = arith.constant 0 : i32
    %c0_i32_1 = arith.constant 0 : i32
    return %c0_i32, %c0_i32_0 : i32, i32
  }
  func.func @transform_5(%arg0: i32) -> (i32, i32, i32) {
    %c0_i32 = arith.constant 0 : i32
    %c0_i32_0 = arith.constant 0 : i32
    %c0_i32_1 = arith.constant 0 : i32
    %c0_i32_2 = arith.constant 0 : i32
    return %c0_i32, %c0_i32_0, %c0_i32_1 : i32, i32, i32
  }
  func.func @transform_6(%arg0: i32) -> (i32, i32, i32) {
    %c0_i32 = arith.constant 0 : i32
    %c0_i32_0 = arith.constant 0 : i32
    %c0_i32_1 = arith.constant 0 : i32
    %c0_i32_2 = arith.constant 0 : i32
    return %c0_i32, %c0_i32_0, %c0_i32_1 : i32, i32, i32
  }
  func.func @transform_7(%arg0: i32) -> (i32, i32) {
    %c0_i32 = arith.constant 0 : i32
    %c0_i32_0 = arith.constant 0 : i32
    return %arg0, %c0_i32 : i32, i32
  }
}

</mosaic_0001>

<llo_original>
// kernel: tile.38
$region0: #{tile.38}
  #allocation0 [shape = 's32[1]{0}', space=sflag, size = 0x4, scoped, tag = 'scoped memory for tile.38']
  %s0 = inlined_call_operand.vmem [shape: f32[4], index: 0, kind: input, shape index: {}]
  %s1 = inlined_call_operand.vmem [shape: f32[2,4], index: 1, kind: output, shape index: {}]
  // Predicated region
  $region2: #{tile.38} parent=0 // pred_check
    _
  $region3: #{tile.38} parent=0 // pred_check_branch
    %3 = sbr.rel (0) target = $region5
  $region4: #{tile.38} parent=0 // pred_region
    _
  $region5: #{tile.38} parent=0 // pred_fallthru
    _
  %v4 = vld [vmem:[%s0] ss:$0 sm:$0xff]
  %5 = vst [vmem:[%s1] sm:$0x3] %v4

// kernel: tile.39
$region0: #{tile.39}
  %s0 = inlined_call_operand.vmem [shape: f32[2,4], index: 0, kind: input, shape index: {}]
  %s1 = inlined_call_operand.vmem [shape: f32[8], index: 1, kind: output, shape index: {}]
  $region1: #{tile.39} parent=0
    #allocation0 [shape = 'u8[4096]{0}', space=vmem, size = 0x1000, scoped, tag = 'scoped mem for output reshape']
    #allocation1 [shape = 'u8[4096]{0}', space=vmem, size = 0x1000, scoped, tag = 'scoped mem for input reshape']
    %s3 = sshllo.u32 0, 2
    %v4 = vld [vmem:[%s0] sm:%s3]
    %5 = vst [vmem:[#allocation1] sm:%s3] %v4
    %v6 = vld [vmem:[#allocation1] sm:$0x1]
    %vm7 = vcmask 31744
    %8 = vst.msk [vmem:[#allocation0] sm:$0x1] %vm7, %v6
    %s9 = scalar_lea.vmem [#allocation1], 1
    %v10 = vld [vmem:[%s9] sm:$0x1]
    %11 = vrot.lane.b32.xlu0 %v10, 4
    %v12 = vpop.permute.xlu0 %11
    %vm13 = vcmask 64544
    %14 = vst.msk [vmem:[#allocation0] sm:$0x1] %vm13, %v12
    %s16 = sshllo.u32 0, 1
    %v18 = vld [vmem:[#allocation0] sm:%s16]
    %s19 = sshllo.u32 0, 1
    %20 = vst [vmem:[%s1] sm:%s19] %v18

// kernel: upsampling_block_forward.1
$region0: #{upsampling_block_forward.1}
  #allocation0 [shape = 'u32[]', space=smem, size = 0x4, offset = 0x4, fixed_abs, tag = 'smem constant byte address 0x4 - core index']
  #allocation1 [shape = 'u32[144,128]{1,0:T(1,128)}', space=vmem, size = 0x12000, scoped, tag = 'internal scratch']
  %s0 = inlined_call_operand.vmem [shape: bf16[16,128], index: 0, kind: input, shape index: {}]
  %s1 = inlined_call_operand.vmem [shape: bf16[16,128], index: 1, kind: input, shape index: {}]
  %s2 = inlined_call_operand.vmem [shape: bf16[16,128], index: 2, kind: input, shape index: {}]
  %s3 = inlined_call_operand.vmem [shape: bf16[16,24], index: 3, kind: input, shape index: {}]
  %s4 = inlined_call_operand.vmem [shape: f32[16,1], index: 4, kind: input, shape index: {}]
  %s5 = inlined_call_operand.vmem [shape: bf16[2,16,48], index: 5, kind: input, shape index: {}]
  %s6 = inlined_call_operand.vmem [shape: f32[2,16,1], index: 6, kind: input, shape index: {}]
  %s7 = inlined_call_operand.hbm [shape: f32[16,128], index: 7, kind: output, shape index: {}]
  %s8 = sld [smem:[#allocation0]]
  $region61: #{upsampling_block_forward.1} parent=0
    _
  %s10 = ssub.s32 1, %s8
  %s11 = scalar_select 0, %s10, %s8
  $region1: #{upsampling_block_forward.1} parent=0
    #allocation2 [shape = 'u8[8192]{0}', space=vmem, size = 0x2000, scoped, tag = 'output window, operand 0']
    #allocation3 [shape = 's32[2]{0}', space=sflag, size = 0x8, scoped, tag = 'scoped memory for upsampling_block_forward.1']
    %12 = vsyncpa [#allocation3], 0
    %s13 = scalar_lea.sflag [#allocation3], 1
    %14 = vsyncpa %s13, 0
    loop: start=0, step=1, limit=4
    $region2: #{upsampling_block_forward.1} parent=1 // loop_pre_header
      _
    $region3: #{upsampling_block_forward.1} parent=1 // loop_header
      %s16 = sphi 0, %s20
      %p17 = scmp.ge.s32.totalorder %s16, 4
      %s26 = sphi 0, %s28
      %s29 = sphi 0, %s26
      %s30 = sphi 0, %s29
      %s46 = sphi 0, %s30
      %s52 = sphi 0, %s54
      %s55 = sphi 0, %s52
      %s56 = sphi 0, %s55
      %s72 = sphi 0, %s56
      %s78 = sphi 0, %s80
      %s81 = sphi 0, %s78
      %s82 = sphi 0, %s81
      %s98 = sphi 0, %s82
      %s102 = sphi 0, %s102
      %s104 = sphi 0, %s102
      %s105 = sphi 0, %s104
      %s119 = sphi 0, %s105
      %s123 = sphi 0, %s123
      %s125 = sphi 0, %s123
      %s126 = sphi 0, %s125
      %s140 = sphi 0, %s126
      %s144 = sphi 0, %s144
      %s146 = sphi 0, %s144
      %s147 = sphi 0, %s146
      %s161 = sphi 0, %s147
      %s165 = sphi 0, %s165
      %s167 = sphi 0, %s165
      %s168 = sphi 0, %s167
      %s182 = sphi 0, %s168
      %s188 = sphi 0, %s190
      %s191 = sphi 0, %s188
      %s192 = sphi 0, %s191
      %s208 = sphi 0, %s192
    $region4: #{upsampling_block_forward.1} parent=1 // loop_header_branch
      %19 = sbr.rel (%p17) target = $region8
    $region5: #{upsampling_block_forward.1} parent=1 // loop_body
      %s21 = ssub.s32 %s16, 1
      %s22 = ssub.s32 %s16, 2
      %s23 = sadd.s32 %s16, 1
      %s24 = ssub.s32 %s16, %s23
      %p25 = scmp.eq.s32.totalorder %s24, 0
      %s27 = sadd.s32 %s26, 1
      %s28 = scalar_select %p25, %s26, %s27
      %p31 = pneg %p25
      %p32 = scmp.eq.s32.totalorder %s16, 1
      %p33 = por %p31, %p32
      %p34 = scmp.ne.s32.totalorder %s26, %s29
      %p35 = scmp.eq.s32.totalorder %s16, 0
      %p36 = por %p34, %p35
      %p37 = scmp.ne.s32.totalorder %s26, %s29
      %p38 = scmp.eq.s32.totalorder %s21, 1
      %p39 = por %p37, %p38
      %p40 = scmp.ne.s32.totalorder %s29, %s30
      %p41 = scmp.eq.s32.totalorder %s21, 0
      %p42 = por %p40, %p41
      %p43 = scmp.ne.s32.totalorder %s29, %s30
      %p44 = scmp.eq.s32.totalorder %s22, 1
      %p45 = por %p43, %p44
      %p47 = scmp.ne.s32.totalorder %s30, %s46
      %p48 = scmp.eq.s32.totalorder %s22, 0
      %p49 = por %p47, %p48
      %s50 = ssub.s32 %s16, %s23
      %p51 = scmp.eq.s32.totalorder %s50, 0
      %s53 = sadd.s32 %s52, 1
      %s54 = scalar_select %p51, %s52, %s53
      %p57 = pneg %p51
      %p58 = scmp.eq.s32.totalorder %s16, 1
      %p59 = por %p57, %p58
      %p60 = scmp.ne.s32.totalorder %s52, %s55
      %p61 = scmp.eq.s32.totalorder %s16, 0
      %p62 = por %p60, %p61
      %p63 = scmp.ne.s32.totalorder %s52, %s55
      %p64 = scmp.eq.s32.totalorder %s21, 1
      %p65 = por %p63, %p64
      %p66 = scmp.ne.s32.totalorder %s55, %s56
      %p67 = scmp.eq.s32.totalorder %s21, 0
      %p68 = por %p66, %p67
      %p69 = scmp.ne.s32.totalorder %s55, %s56
      %p70 = scmp.eq.s32.totalorder %s22, 1
      %p71 = por %p69, %p70
      %p73 = scmp.ne.s32.totalorder %s56, %s72
      %p74 = scmp.eq.s32.totalorder %s22, 0
      %p75 = por %p73, %p74
      %s76 = ssub.s32 %s16, %s23
      %p77 = scmp.eq.s32.totalorder %s76, 0
      %s79 = sadd.s32 %s78, 1
      %s80 = scalar_select %p77, %s78, %s79
      %p83 = pneg %p77
      %p84 = scmp.eq.s32.totalorder %s16, 1
      %p85 = por %p83, %p84
      %p86 = scmp.ne.s32.totalorder %s78, %s81
      %p87 = scmp.eq.s32.totalorder %s16, 0
      %p88 = por %p86, %p87
      %p89 = scmp.ne.s32.totalorder %s78, %s81
      %p90 = scmp.eq.s32.totalorder %s21, 1
      %p91 = por %p89, %p90
      %p92 = scmp.ne.s32.totalorder %s81, %s82
      %p93 = scmp.eq.s32.totalorder %s21, 0
      %p94 = por %p92, %p93
      %p95 = scmp.ne.s32.totalorder %s81, %s82
      %p96 = scmp.eq.s32.totalorder %s22, 1
      %p97 = por %p95, %p96
      %p99 = scmp.ne.s32.totalorder %s82, %s98
      %p100 = scmp.eq.s32.totalorder %s22, 0
      %p101 = por %p99, %p100
      %s103 = sadd.s32 %s102, 1
      %p106 = scmp.eq.s32.totalorder %s16, 1
      %p107 = scmp.ne.s32.totalorder %s102, %s104
      %p108 = scmp.eq.s32.totalorder %s16, 0
      %p109 = por %p107, %p108
      %p110 = scmp.ne.s32.totalorder %s102, %s104
      %p111 = scmp.eq.s32.totalorder %s21, 1
      %p112 = por %p110, %p111
      %p113 = scmp.ne.s32.totalorder %s104, %s105
      %p114 = scmp.eq.s32.totalorder %s21, 0
      %p115 = por %p113, %p114
      %p116 = scmp.ne.s32.totalorder %s104, %s105
      %p117 = scmp.eq.s32.totalorder %s22, 1
      %p118 = por %p116, %p117
      %p120 = scmp.ne.s32.totalorder %s105, %s119
      %p121 = scmp.eq.s32.totalorder %s22, 0
      %p122 = por %p120, %p121
      %s124 = sadd.s32 %s123, 1
      %p127 = scmp.eq.s32.totalorder %s16, 1
      %p128 = scmp.ne.s32.totalorder %s123, %s125
      %p129 = scmp.eq.s32.totalorder %s16, 0
      %p130 = por %p128, %p129
      %p131 = scmp.ne.s32.totalorder %s123, %s125
      %p132 = scmp.eq.s32.totalorder %s21, 1
      %p133 = por %p131, %p132
      %p134 = scmp.ne.s32.totalorder %s125, %s126
      %p135 = scmp.eq.s32.totalorder %s21, 0
      %p136 = por %p134, %p135
      %p137 = scmp.ne.s32.totalorder %s125, %s126
      %p138 = scmp.eq.s32.totalorder %s22, 1
      %p139 = por %p137, %p138
      %p141 = scmp.ne.s32.totalorder %s126, %s140
      %p142 = scmp.eq.s32.totalorder %s22, 0
      %p143 = por %p141, %p142
      %s145 = sadd.s32 %s144, 1
      %p148 = scmp.eq.s32.totalorder %s16, 1
      %p149 = scmp.ne.s32.totalorder %s144, %s146
      %p150 = scmp.eq.s32.totalorder %s16, 0
      %p151 = por %p149, %p150
      %p152 = scmp.ne.s32.totalorder %s144, %s146
      %p153 = scmp.eq.s32.totalorder %s21, 1
      %p154 = por %p152, %p153
      %p155 = scmp.ne.s32.totalorder %s146, %s147
      %p156 = scmp.eq.s32.totalorder %s21, 0
      %p157 = por %p155, %p156
      %p158 = scmp.ne.s32.totalorder %s146, %s147
      %p159 = scmp.eq.s32.totalorder %s22, 1
      %p160 = por %p158, %p159
      %p162 = scmp.ne.s32.totalorder %s147, %s161
      %p163 = scmp.eq.s32.totalorder %s22, 0
      %p164 = por %p162, %p163
      %s166 = sadd.s32 %s165, 1
      %p169 = scmp.eq.s32.totalorder %s16, 1
      %p170 = scmp.ne.s32.totalorder %s165, %s167
      %p171 = scmp.eq.s32.totalorder %s16, 0
      %p172 = por %p170, %p171
      %p173 = scmp.ne.s32.totalorder %s165, %s167
      %p174 = scmp.eq.s32.totalorder %s21, 1
      %p175 = por %p173, %p174
      %p176 = scmp.ne.s32.totalorder %s167, %s168
      %p177 = scmp.eq.s32.totalorder %s21, 0
      %p178 = por %p176, %p177
      %p179 = scmp.ne.s32.totalorder %s167, %s168
      %p180 = scmp.eq.s32.totalorder %s22, 1
      %p181 = por %p179, %p180
      %p183 = scmp.ne.s32.totalorder %s168, %s182
      %p184 = scmp.eq.s32.totalorder %s22, 0
      %p185 = por %p183, %p184
      %s186 = ssub.s32 %s16, %s23
      %p187 = scmp.eq.s32.totalorder %s186, 0
      %s189 = sadd.s32 %s188, 1
      %s190 = scalar_select %p187, %s188, %s189
      %p193 = pneg %p187
      %p194 = scmp.eq.s32.totalorder %s16, 1
      %p195 = por %p193, %p194
      %p196 = scmp.ne.s32.totalorder %s188, %s191
      %p197 = scmp.eq.s32.totalorder %s16, 0
      %p198 = por %p196, %p197
      %p199 = scmp.ne.s32.totalorder %s188, %s191
      %p200 = scmp.eq.s32.totalorder %s21, 1
      %p201 = por %p199, %p200
      %p202 = scmp.ne.s32.totalorder %s191, %s192
      %p203 = scmp.eq.s32.totalorder %s21, 0
      %p204 = por %p202, %p203
      %p205 = scmp.ne.s32.totalorder %s191, %s192
      %p206 = scmp.eq.s32.totalorder %s22, 1
      %p207 = por %p205, %p206
      %p209 = scmp.ne.s32.totalorder %s192, %s208
      %p210 = scmp.eq.s32.totalorder %s22, 0
      %p211 = por %p209, %p210
      %p212 = scmp.le.s32.totalorder 1, %s16
      %p213 = scmp.lt.s32.totalorder %s16, 3
      %p214 = pnand %p212, %p213
      %p215 = pneg %p214
      // Predicated region
      $region9: #{upsampling_block_forward.1} parent=5 // pred_check
        _
      $region10: #{upsampling_block_forward.1} parent=5 // pred_check_branch
        %217 = sbr.rel (%p214) target = $region12
      $region11: #{upsampling_block_forward.1} parent=5 // pred_region
        %s218 = ssub.s32 %s16, 1
        // Predicated region
        $region13: #{upsampling_block_forward.1} parent=11 // pred_check
          %p219 = pneg %p115
        $region14: #{upsampling_block_forward.1} parent=11 // pred_check_branch
          %221 = sbr.rel (%p219) target = $region16
        $region15: #{upsampling_block_forward.1} parent=11 // pred_region
          _
        $region16: #{upsampling_block_forward.1} parent=11 // pred_fallthru
          _
        // Predicated region
        $region17: #{upsampling_block_forward.1} parent=11 // pred_check
          %p222 = pneg %p136
        $region18: #{upsampling_block_forward.1} parent=11 // pred_check_branch
          %224 = sbr.rel (%p222) target = $region20
        $region19: #{upsampling_block_forward.1} parent=11 // pred_region
          _
        $region20: #{upsampling_block_forward.1} parent=11 // pred_fallthru
          _
        // Predicated region
        $region21: #{upsampling_block_forward.1} parent=11 // pred_check
          %p225 = pneg %p157
        $region22: #{upsampling_block_forward.1} parent=11 // pred_check_branch
          %227 = sbr.rel (%p225) target = $region24
        $region23: #{upsampling_block_forward.1} parent=11 // pred_region
          _
        $region24: #{upsampling_block_forward.1} parent=11 // pred_fallthru
          _
        // Predicated region
        $region25: #{upsampling_block_forward.1} parent=11 // pred_check
          %p228 = pneg %p178
        $region26: #{upsampling_block_forward.1} parent=11 // pred_check_branch
          %230 = sbr.rel (%p228) target = $region28
        $region27: #{upsampling_block_forward.1} parent=11 // pred_region
          _
        $region28: #{upsampling_block_forward.1} parent=11 // pred_fallthru
          _
      $region12: #{upsampling_block_forward.1} parent=5 // pred_fallthru
        _
      %p231 = scmp.lt.s32.totalorder %s16, 2
      // Predicated region
      $region29: #{upsampling_block_forward.1} parent=5 // pred_check
        %p232 = pneg %p231
      $region30: #{upsampling_block_forward.1} parent=5 // pred_check_branch
        %234 = sbr.rel (%p232) target = $region32
      $region31: #{upsampling_block_forward.1} parent=5 // pred_region
        // Predicated region
        $region33: #{upsampling_block_forward.1} parent=31 // pred_check
          %p235 = pneg %p36
        $region34: #{upsampling_block_forward.1} parent=31 // pred_check_branch
          %237 = sbr.rel (%p235) target = $region36
        $region35: #{upsampling_block_forward.1} parent=31 // pred_region
          %p238 = scmp.lt.s32.totalorder %s16, 1
          %s239 = scalar_select %p238, %s16, 1
          %s240 = smul.addr %s239, 4
          %s241 = scalar_lea.vmem %s0, %s240
        $region36: #{upsampling_block_forward.1} parent=31 // pred_fallthru
          _
        // Predicated region
        $region37: #{upsampling_block_forward.1} parent=31 // pred_check
          %p242 = pneg %p62
        $region38: #{upsampling_block_forward.1} parent=31 // pred_check_branch
          %244 = sbr.rel (%p242) target = $region40
        $region39: #{upsampling_block_forward.1} parent=31 // pred_region
          %p245 = scmp.lt.s32.totalorder %s16, 1
          %s246 = scalar_select %p245, %s16, 1
          %s247 = smul.addr %s246, 4
          %s248 = scalar_lea.vmem %s1, %s247
        $region40: #{upsampling_block_forward.1} parent=31 // pred_fallthru
          _
        // Predicated region
        $region41: #{upsampling_block_forward.1} parent=31 // pred_check
          %p249 = pneg %p88
        $region42: #{upsampling_block_forward.1} parent=31 // pred_check_branch
          %251 = sbr.rel (%p249) target = $region44
        $region43: #{upsampling_block_forward.1} parent=31 // pred_region
          %p252 = scmp.lt.s32.totalorder %s16, 1
          %s253 = scalar_select %p252, %s16, 1
          %s254 = smul.addr %s253, 4
          %s255 = scalar_lea.vmem %s2, %s254
        $region44: #{upsampling_block_forward.1} parent=31 // pred_fallthru
          _
      $region32: #{upsampling_block_forward.1} parent=5 // pred_fallthru
        _
      %p256 = scmp.le.s32.totalorder 1, %s16
      %p257 = scmp.lt.s32.totalorder %s16, 3
      %p258 = pnand %p256, %p257
      %p259 = pneg %p258
      // Predicated region
      $region45: #{upsampling_block_forward.1} parent=5 // pred_check
        _
      $region46: #{upsampling_block_forward.1} parent=5 // pred_check_branch
        %261 = sbr.rel (%p258) target = $region48
      $region47: #{upsampling_block_forward.1} parent=5 // pred_region
        %s262 = ssub.s32 %s16, 1
        %p263 = scmp.lt.s32.totalorder %s21, 1
        %s264 = scalar_select %p263, %s21, 1
        %s265 = smul.addr %s264, 4
        %s266 = scalar_lea.vmem %s0, %s265
        %p267 = pneg %p42
        %p268 = pneg %p39
        %p269 = scmp.lt.s32.totalorder %s21, 1
        %s270 = scalar_select %p269, %s21, 1
        %s271 = smul.addr %s270, 4
        %s272 = scalar_lea.vmem %s1, %s271
        %p273 = pneg %p68
        %p274 = pneg %p65
        %p275 = scmp.lt.s32.totalorder %s21, 1
        %s276 = scalar_select %p275, %s21, 1
        %s277 = smul.addr %s276, 4
        %s278 = scalar_lea.vmem %s2, %s277
        %p279 = pneg %p94
        %p280 = pneg %p91
        %p281 = pneg %p115
        %p282 = pneg %p112
        %p283 = pneg %p136
        %p284 = pneg %p133
        %p285 = pneg %p157
        %p286 = pneg %p154
        %p287 = pneg %p178
        %p288 = pneg %p175
        %p289 = pneg %p204
        %p290 = pneg %p201
        %s291 = sand.u32 %s191, 1
        %s292 = scalar_lea.sflag [#allocation3], %s291
        %s293 = sand.u32 %s191, 1
        %s294 = smul.addr %s293, 8
        %s295 = scalar_lea.vmem [#allocation2], %s294
        %p296 = scmp.lt.s32.totalorder %s21, 1
        %s297 = scalar_select %p296, %s21, 1
        %s298 = smul.addr %s297, 4
        %s299 = scalar_lea.vmem %s0, %s298
        %p300 = scmp.lt.s32.totalorder %s21, 1
        %s301 = scalar_select %p300, %s21, 1
        %s302 = smul.addr %s301, 4
        %s303 = scalar_lea.vmem %s1, %s302
        %p304 = scmp.lt.s32.totalorder %s21, 1
        %s305 = scalar_select %p304, %s21, 1
        %s306 = smul.addr %s305, 4
        %s307 = scalar_lea.vmem %s2, %s306
        %v309 = vld [vmem:[%s299] sm:$0xf]
        %v310 = vunpack.c.l.bf16 %v309
        %v311 = vld [vmem:[%s307] sm:$0xf]
        %v312 = vunpack.c.l.bf16 %v311
        %v313 = vld [vmem:[%s3] sm:$0xf]
        %v314 = vld [vmem:[%s3 + $0x4] sm:$0xf]
        %315 = vrot.lane.b32.xlu0 %v310, 127
        %v316 = vpop.permute.xlu0 %315
        %317 = vrot.lane.b32.xlu0 %v310, 126
        %v318 = vpop.permute.xlu0 %317
        %v319 = vpack.c.bf16 %v316, %v310
        %v320 = vpack.c.bf16 %v318, %v318
        %v321 = vld [vmem:[%s4] sm:$0xff]
        %v322 = vld [vmem:[%s4 + $0x8] sm:$0xff]
        %324 = vset.pattern.permute.xlu0 0
        %325 = vperm.xlu0 %324, %v321
        %v326 = vpop.permute.xlu0 %325
        %329 = vset.pattern.permute.xlu0 0
        %330 = vperm.xlu0 %329, %v322
        %v331 = vpop.permute.xlu0 %330
        %v335 = vunpack.c.l.b16 %v313
        %v336 = vunpack.c.l.b16 %v314
        %v337 = vpack.c.b16 %v336, %v335
        %vm338 = vcmask 195584
        %v340 = vsel %vm338, %v337, 0
        %vm342 = vcmask 1043456
        %v344 = vsel %vm342, %v320, 0
        %346 = vmatprep.subr.bf16.mxu0 0
        %347 = vmatpush1.bf16.msra.mxu0 %v319
        %348 = vmatprep.subr.bf16.mxu0 0
        %349 = vmatpush1.bf16.msra.mxu0 %v344
        %350 = vmatprep.subr.bf16.mxu0 0
        %351 = vmatpush1.bf16.msra.mxu0 0
        %352 = vmatprep.subr.bf16.mxu0 0
        %353 = vmatpush1.bf16.msra.mxu0 0
        %354 = vmatprep.subr.bf16.mxu0 0
        %355 = vmatpush1.bf16.msra.mxu0 0
        %356 = vmatprep.subr.bf16.mxu0 0
        %357 = vmatpush1.bf16.msra.mxu0 0
        %358 = vmatprep.subr.bf16.mxu0 0
        %359 = vmatpush1.bf16.msra.mxu0 0
        %360 = vmatprep.subr.bf16.mxu0 0
        %361 = vmatpush1.bf16.msra.mxu0 0
        %362 = vmatprep.subr.bf16.mxu0 0
        %363 = vmatpush1.bf16.msra.mxu0 0
        %364 = vmatprep.subr.bf16.mxu0 0
        %365 = vmatpush1.bf16.msra.mxu0 0
        %366 = vmatprep.subr.bf16.mxu0 0
        %367 = vmatpush1.bf16.msra.mxu0 0
        %368 = vmatprep.subr.bf16.mxu0 0
        %369 = vmatpush1.bf16.msra.mxu0 0
        %370 = vmatprep.subr.bf16.mxu0 0
        %371 = vmatpush1.bf16.msra.mxu0 0
        %372 = vmatprep.subr.bf16.mxu0 0
        %373 = vmatpush1.bf16.msra.mxu0 0
        %374 = vmatprep.subr.bf16.mxu0 0
        %375 = vmatpush1.bf16.msra.mxu0 0
        %376 = vmatprep.subr.bf16.mxu0 0
        %377 = vmatpush1.bf16.msra.mxu0 0
        %378 = vmatprep.mubr.bf16.mxu0 0
        %379 = vmatmul.mubr.bf16.gmra.mrb[0].mxu0 %v340
        %v380 = vpop.f32.mrb[0].mxu0
        %v381 = vadd.f32 %v326, %v380
        %v382 = vpop.f32.mrb[0].mxu0
        %v383 = vpop.f32.mrb[0].mxu0
        %v384 = vadd.f32 %v331, %v383
        %v385 = vpop.f32.mrb[0].mxu0
        %386 = vdwg.mxu0
        %v387 = vld [vmem:[%s303] sm:$0xf]
        %v388 = vunpack.c.l.bf16 %v387
        %v389 = vtanh.pop %v381
        %v390 = vxor.u32 %v384, 2147483648
        %v391 = vmul.f32 %v390, 1.442695
        %v392 = vpow.pop %v391
        %v393 = vadd.f32 %v392, 1.0
        %v394 = vrcp.pop %v393
        %v395 = vmul.f32 1.0, %v394
        %v396 = vmul.f32 %v389, %v395
        %v397 = vadd.f32 %v388, %v396
        %398 = vrot.lane.b32.xlu0 %v312, 125
        %v399 = vpop.permute.xlu0 %398
        %400 = vrot.lane.b32.xlu0 %v399, 127
        %v401 = vpop.permute.xlu0 %400
        %402 = vrot.lane.b32.xlu0 %v399, 126
        %v403 = vpop.permute.xlu0 %402
        %404 = vrot.lane.b32.xlu0 %v397, 127
        %v405 = vpop.permute.xlu0 %404
        %406 = vrot.lane.b32.xlu0 %v397, 126
        %v407 = vpop.permute.xlu0 %406
        %v408 = vld [vmem:[%s5] sm:$0xf]
        %v409 = vld [vmem:[%s5 + $0x4] sm:$0xf]
        %v410 = vpack.c.bf16 %v401, %v399
        %v411 = vpack.c.bf16 %v397, %v403
        %v412 = vpack.c.bf16 %v407, %v405
        %v413 = vld [vmem:[%s6] sm:$0xff]
        %v414 = vld [vmem:[%s6 + $0x8] sm:$0xff]
        %416 = vset.pattern.permute.xlu0 0
        %417 = vperm.xlu0 %416, %v413
        %v418 = vpop.permute.xlu0 %417
        %421 = vset.pattern.permute.xlu0 0
        %422 = vperm.xlu0 %421, %v414
        %v423 = vpop.permute.xlu0 %422
        %v427 = vunpack.c.l.b16 %v408
        %v428 = vunpack.c.l.b16 %v409
        %v429 = vpack.c.b16 %v428, %v427
        %vm430 = vcmask 392192
        %v432 = vsel %vm430, %v429, 0
        %434 = vmatprep.subr.bf16.mxu0 0
        %435 = vmatpush1.bf16.msra.mxu0 %v410
        %436 = vmatprep.subr.bf16.mxu0 0
        %437 = vmatpush1.bf16.msra.mxu0 %v411
        %438 = vmatprep.subr.bf16.mxu0 0
        %439 = vmatpush1.bf16.msra.mxu0 %v412
        %440 = vmatprep.subr.bf16.mxu0 0
        %441 = vmatpush1.bf16.msra.mxu0 0
        %442 = vmatprep.subr.bf16.mxu0 0
        %443 = vmatpush1.bf16.msra.mxu0 0
        %444 = vmatprep.subr.bf16.mxu0 0
        %445 = vmatpush1.bf16.msra.mxu0 0
        %446 = vmatprep.subr.bf16.mxu0 0
        %447 = vmatpush1.bf16.msra.mxu0 0
        %448 = vmatprep.subr.bf16.mxu0 0
        %449 = vmatpush1.bf16.msra.mxu0 0
        %450 = vmatprep.subr.bf16.mxu0 0
        %451 = vmatpush1.bf16.msra.mxu0 0
        %452 = vmatprep.subr.bf16.mxu0 0
        %453 = vmatpush1.bf16.msra.mxu0 0
        %454 = vmatprep.subr.bf16.mxu0 0
        %455 = vmatpush1.bf16.msra.mxu0 0
        %456 = vmatprep.subr.bf16.mxu0 0
        %457 = vmatpush1.bf16.msra.mxu0 0
        %458 = vmatprep.subr.bf16.mxu0 0
        %459 = vmatpush1.bf16.msra.mxu0 0
        %460 = vmatprep.subr.bf16.mxu0 0
        %461 = vmatpush1.bf16.msra.mxu0 0
        %462 = vmatprep.subr.bf16.mxu0 0
        %463 = vmatpush1.bf16.msra.mxu0 0
        %464 = vmatprep.subr.bf16.mxu0 0
        %465 = vmatpush1.bf16.msra.mxu0 0
        %466 = vmatprep.mubr.bf16.mxu0 0
        %467 = vmatmul.mubr.bf16.gmra.mrb[0].mxu0 %v432
        %v468 = vpop.f32.mrb[0].mxu0
        %v469 = vadd.f32 %v418, %v468
        %v470 = vpop.f32.mrb[0].mxu0
        %v471 = vpop.f32.mrb[0].mxu0
        %v472 = vadd.f32 %v423, %v471
        %v473 = vpop.f32.mrb[0].mxu0
        %474 = vdwg.mxu0
        %v475 = vtanh.pop %v469
        %v476 = vxor.u32 %v472, 2147483648
        %v477 = vmul.f32 %v476, 1.442695
        %v478 = vpow.pop %v477
        %v479 = vadd.f32 %v478, 1.0
        %v480 = vrcp.pop %v479
        %v481 = vmul.f32 1.0, %v480
        %v482 = vmul.f32 %v475, %v481
        %v483 = vadd.f32 %v403, %v482
        %484 = vrot.lane.b32.xlu0 %v483, 127
        %v485 = vpop.permute.xlu0 %484
        %486 = vrot.lane.b32.xlu0 %v483, 126
        %v487 = vpop.permute.xlu0 %486
        %488 = vrot.lane.b32.xlu0 %v397, 125
        %v489 = vpop.permute.xlu0 %488
        %490 = vrot.lane.b32.xlu0 %v397, 124
        %v491 = vpop.permute.xlu0 %490
        %s492 = scalar_lea.vmem %s5, 8
        %v493 = vld [vmem:[%s492] sm:$0xf]
        %v494 = vld [vmem:[%s492 + $0x4] sm:$0xf]
        %v495 = vpack.c.bf16 %v485, %v483
        %v496 = vpack.c.bf16 %v407, %v487
        %v497 = vpack.c.bf16 %v491, %v489
        %s498 = scalar_lea.vmem %s6, 16
        %v499 = vld [vmem:[%s498] sm:$0xff]
        %v500 = vld [vmem:[%s498 + $0x8] sm:$0xff]
        %502 = vset.pattern.permute.xlu0 0
        %503 = vperm.xlu0 %502, %v499
        %v504 = vpop.permute.xlu0 %503
        %507 = vset.pattern.permute.xlu0 0
        %508 = vperm.xlu0 %507, %v500
        %v509 = vpop.permute.xlu0 %508
        %v513 = vunpack.c.l.b16 %v493
        %v514 = vunpack.c.l.b16 %v494
        %v515 = vpack.c.b16 %v514, %v513
        %v517 = vsel %vm430, %v515, 0
        %519 = vmatprep.subr.bf16.mxu0 0
        %520 = vmatpush1.bf16.msra.mxu0 %v495
        %521 = vmatprep.subr.bf16.mxu0 0
        %522 = vmatpush1.bf16.msra.mxu0 %v496
        %523 = vmatprep.subr.bf16.mxu0 0
        %524 = vmatpush1.bf16.msra.mxu0 %v497
        %525 = vmatprep.subr.bf16.mxu0 0
        %526 = vmatpush1.bf16.msra.mxu0 0
        %527 = vmatprep.subr.bf16.mxu0 0
        %528 = vmatpush1.bf16.msra.mxu0 0
        %529 = vmatprep.subr.bf16.mxu0 0
        %530 = vmatpush1.bf16.msra.mxu0 0
        %531 = vmatprep.subr.bf16.mxu0 0
        %532 = vmatpush1.bf16.msra.mxu0 0
        %533 = vmatprep.subr.bf16.mxu0 0
        %534 = vmatpush1.bf16.msra.mxu0 0
        %535 = vmatprep.subr.bf16.mxu0 0
        %536 = vmatpush1.bf16.msra.mxu0 0
        %537 = vmatprep.subr.bf16.mxu0 0
        %538 = vmatpush1.bf16.msra.mxu0 0
        %539 = vmatprep.subr.bf16.mxu0 0
        %540 = vmatpush1.bf16.msra.mxu0 0
        %541 = vmatprep.subr.bf16.mxu0 0
        %542 = vmatpush1.bf16.msra.mxu0 0
        %543 = vmatprep.subr.bf16.mxu0 0
        %544 = vmatpush1.bf16.msra.mxu0 0
        %545 = vmatprep.subr.bf16.mxu0 0
        %546 = vmatpush1.bf16.msra.mxu0 0
        %547 = vmatprep.subr.bf16.mxu0 0
        %548 = vmatpush1.bf16.msra.mxu0 0
        %549 = vmatprep.subr.bf16.mxu0 0
        %550 = vmatpush1.bf16.msra.mxu0 0
        %551 = vmatprep.mubr.bf16.mxu0 0
        %552 = vmatmul.mubr.bf16.gmra.mrb[0].mxu0 %v517
        %v553 = vpop.f32.mrb[0].mxu0
        %v554 = vadd.f32 %v504, %v553
        %v555 = vpop.f32.mrb[0].mxu0
        %v556 = vpop.f32.mrb[0].mxu0
        %v557 = vadd.f32 %v509, %v556
        %v558 = vpop.f32.mrb[0].mxu0
        %559 = vdwg.mxu0
        %v560 = vtanh.pop %v554
        %v561 = vxor.u32 %v557, 2147483648
        %v562 = vmul.f32 %v561, 1.442695
        %v563 = vpow.pop %v562
        %v564 = vadd.f32 %v563, 1.0
        %v565 = vrcp.pop %v564
        %v566 = vmul.f32 1.0, %v565
        %v567 = vmul.f32 %v560, %v566
        %v568 = vadd.f32 %v487, %v567
        %569 = vst [vmem:[%s295] sm:$0xff] %v568
        %s570 = sand.u32 %s191, 1
        %s571 = scalar_lea.sflag [#allocation3], %s570
        %s572 = sand.u32 %s191, 1
        %s573 = smul.addr %s572, 8
        %s574 = scalar_lea.vmem [#allocation2], %s573
        // Predicated region
        $region49: #{upsampling_block_forward.1} parent=47 // pred_check
          %p575 = pneg %p201
        $region50: #{upsampling_block_forward.1} parent=47 // pred_check_branch
          %577 = sbr.rel (%p575) target = $region52
        $region51: #{upsampling_block_forward.1} parent=47 // pred_region
          %s579 = ssub.s32 128, 128
          %580 = vsyncadd %s571, %s579
          %s581 = smul.addr %s21, 128
          %s582 = scalar_lea.hbm %s7, %s581
          %s584 = sshll.u32 %s574, 4
          %s585 = int_to_ptr.vmem [resolvable:$true] %s584
          %587 = dma.vmem_to_hbm [thread:$0]  %s585, 128, %s582, %s571
        $region52: #{upsampling_block_forward.1} parent=47 // pred_fallthru
          _
      $region48: #{upsampling_block_forward.1} parent=5 // pred_fallthru
        _
      %p588 = scmp.le.s32.totalorder 2, %s16
      // Predicated region
      $region53: #{upsampling_block_forward.1} parent=5 // pred_check
        %p589 = pneg %p588
      $region54: #{upsampling_block_forward.1} parent=5 // pred_check_branch
        %591 = sbr.rel (%p589) target = $region56
      $region55: #{upsampling_block_forward.1} parent=5 // pred_region
        %s592 = ssub.s32 %s16, 2
        // Predicated region
        $region57: #{upsampling_block_forward.1} parent=55 // pred_check
          %p593 = pneg %p207
        $region58: #{upsampling_block_forward.1} parent=55 // pred_check_branch
          %595 = sbr.rel (%p593) target = $region60
        $region59: #{upsampling_block_forward.1} parent=55 // pred_region
          %s596 = sand.u32 %s192, 1
          %s597 = scalar_lea.sflag [#allocation3], %s596
          %s598 = sand.u32 %s192, 1
          %s599 = smul.addr %s598, 8
          %s600 = scalar_lea.vmem [#allocation2], %s599
          %601 = dma.done %s597, 128
        $region60: #{upsampling_block_forward.1} parent=55 // pred_fallthru
          _
      $region56: #{upsampling_block_forward.1} parent=5 // pred_fallthru
        _
    $region6: #{upsampling_block_forward.1} parent=1 // loop_footer
      %s20 = sadd.s32 1, %s16
    $region7: #{upsampling_block_forward.1} parent=1 // loop_footer_branch
      %15 = sbr.rel target = $region3
    $region8: #{upsampling_block_forward.1} parent=1 // loop_exit
      _
    %602 = vsyncpa [#allocation3], 1
    %s603 = scalar_lea.sflag [#allocation3], 1
    %604 = vsyncpa %s603, 1

</llo_original>
